<compile_context>
chip_gen: v7x
topology: tpu7x:2x2x1
jax: 0.10.0
libtpu: 0.0.40
codegen_flags: <defaults>
</compile_context>

<pallas_src>
import jax
import jax.numpy as jnp
from jax.experimental import pallas as pl
from jax.experimental.pallas import tpu as pltpu

NEG_SLOPE = 0.2  # nn.LeakyReLU(0.2)


# ---------------------------------------------------------------------------
# helpers
# ---------------------------------------------------------------------------

def _round_up(x: int, m: int) -> int:
    return ((x + m - 1) // m) * m


def _pick_tile_b(batch: int, in_features: int, max_tile_b: int) -> int:
    """Largest (8,128)-legal batch tile within a modest double-buffered VMEM budget."""
    budget_bytes = 8 * 1024 * 1024                       # 2 x-tile buffers, f32
    cap = max(128, (budget_bytes // (2 * in_features * 4)) // 128 * 128)
    cap = min(cap, max(128, (max_tile_b // 128) * 128))  # multiple of 128 lanes
    b8 = _round_up(batch, 8)
    if b8 <= cap:
        return b8      # single block == full (padded) batch -> any multiple of 8 is legal
    return cap         # multi-block: tile is a multiple of 128 (lane-dense output blocks)


# ---------------------------------------------------------------------------
# Pallas kernels
# ---------------------------------------------------------------------------

def _mlp_full_kernel(x_ref, w1_ref, b1_ref, w2_ref, b2_ref, o_ref):
    """o = (LeakyReLU_0.2(W1 @ x^T + b1) * w2_col).sum(axis=0) + b2  ->  (1, TILE_B)."""
    x = x_ref[...]                                       # (TILE_B, IN)  f32
    w1 = w1_ref[...]                                     # (H, IN)       f32
    # fc1 on the MXU, transposed output -> (H, TILE_B): batch lands on lanes.
    h = jax.lax.dot_general(
        w1, x, (((1,), (1,)), ((), ())),                 # contract the IN axes
        preferred_element_type=jnp.float32,
    )
    h = h + b1_ref[...]                                  # b1: (H, 1), lane-broadcast
    h = jnp.where(h > 0, h, NEG_SLOPE * h)               # LeakyReLU(0.2)
    # fc2 (out_features = 1): VPU multiply + sublane reduction (keeps MXU free,
    # result already lane-dense).
    y = jnp.sum(h * w2_ref[...], axis=0, keepdims=True)  # w2: (H, 1) -> y: (1, TILE_B)
    o_ref[...] = y + b2_ref[0, 0]                        # b2 scalar from SMEM


def _fc2_only_kernel(x_ref, w2_ref, b2_ref, o_ref):
    """start_layer_idx == 1 path: o = W2 @ x^T + b2  ->  (1, TILE_B)."""
    x = x_ref[...]                                       # (TILE_B, H)
    y = jax.lax.dot_general(
        w2_ref[...], x, (((1,), (1,)), ((), ())),        # (1, H) x (TILE_B, H) -> (1, TILE_B)
        preferred_element_type=jnp.float32,
    )
    o_ref[...] = y + b2_ref[0, 0]


# ---------------------------------------------------------------------------
# Parameters (deterministic init, PyTorch nn.Linear shapes)
# ---------------------------------------------------------------------------

def init_mlp_params(input_size: int, hidden: int = 64, out: int = 1, seed: int = 0):
    key = jax.random.PRNGKey(seed)
    k1, k2, k3, k4 = jax.random.split(key, 4)
    bound1 = 1.0 / (input_size ** 0.5)
    bound2 = 1.0 / (hidden ** 0.5)
    w1 = jax.random.uniform(k1, (hidden, input_size), jnp.float32, -bound1, bound1)
    b1 = jax.random.uniform(k2, (hidden,), jnp.float32, -bound1, bound1)
    w2 = jax.random.uniform(k3, (out, hidden), jnp.float32, -bound2, bound2)
    b2 = jax.random.uniform(k4, (out,), jnp.float32, -bound2, bound2)
    return {"w1": w1, "b1": b1, "w2": w2, "b2": b2}


# ---------------------------------------------------------------------------
# Wrapper
# ---------------------------------------------------------------------------

def _run_tiled(kernel, x, weight_args, weight_specs, max_tile_b):
    B, in_features = x.shape
    tile_b = _pick_tile_b(B, in_features, max_tile_b)
    b_pad = _round_up(B, tile_b)
    if b_pad != B:
        x = jnp.pad(x, ((0, b_pad - B), (0, 0)))         # padded rows are sliced off below
    grid = (b_pad // tile_b,)

    out = pl.pallas_call(
        kernel,
        out_shape=jax.ShapeDtypeStruct((1, b_pad), jnp.float32),
        grid=grid,
        in_specs=[pl.BlockSpec((tile_b, in_features), lambda i: (i, 0))]  # streamed x
        + weight_specs,                                                    # resident params
        out_specs=pl.BlockSpec((1, tile_b), lambda i: (0, i)),             # lane-dense output
        compiler_params=pltpu.CompilerParams(
            dimension_semantics=("parallel",),           # megacore sharding on v7x
        ),
    )(x, *weight_args)
    return out[:, :B].reshape(B, 1)


def mlp_forward(params, x, start_layer_idx: int = 0, max_tile_b: int = 1024):
    """Mirrors MLP.forward(x, start_layer_idx)."""
    x = x.astype(jnp.float32)                            # x = x.float()
    if start_layer_idx > 1:
        return x

    hidden = params["w1"].shape[0]                       # 64
    resident = lambda shape: pl.BlockSpec(shape, lambda i: (0, 0))
    smem = pl.BlockSpec(memory_space=pltpu.SMEM)
    b2 = params["b2"].reshape(1, 1).astype(jnp.float32)

    if start_layer_idx <= 0:
        in_features = params["w1"].shape[1]
        weight_args = (
            params["w1"].astype(jnp.float32),                       # (H, IN)
            params["b1"].reshape(hidden, 1).astype(jnp.float32),    # (H, 1)
            params["w2"].reshape(hidden, 1).astype(jnp.float32),    # (H, 1) column of W2
            b2,                                                     # (1, 1) scalar -> SMEM
        )
        weight_specs = [
            resident((hidden, in_features)),
            resident((hidden, 1)),
            resident((hidden, 1)),
            smem,
        ]
        return _run_tiled(_mlp_full_kernel, x, weight_args, weight_specs, max_tile_b)

    # start_layer_idx == 1: fc2 only (input is the 64-dim hidden representation)
    weight_args = (params["w2"].astype(jnp.float32), b2)            # (1, H), (1, 1)
    weight_specs = [resident((1, hidden)), smem]
    return _run_tiled(_fc2_only_kernel, x, weight_args, weight_specs, max_tile_b)


# ---------------------------------------------------------------------------
# Plain-JAX references
# ---------------------------------------------------------------------------

def mlp_ref(params, x):
    x = x.astype(jnp.float32)
    h = jnp.dot(x, params["w1"].T, precision=jax.lax.Precision.HIGHEST) + params["b1"]
    h = jnp.where(h > 0, h, NEG_SLOPE * h)
    return jnp.dot(h, params["w2"].T, precision=jax.lax.Precision.HIGHEST) + params["b2"]


def fc2_ref(params, x):
    x = x.astype(jnp.float32)
    return jnp.dot(x, params["w2"].T, precision=jax.lax.Precision.HIGHEST) + params["b2"]


if __name__ == "__main__":
    batch, input_size = 8, 32
    params = init_mlp_params(input_size, seed=0)

    key = jax.random.PRNGKey(0)
    x = jax.random.normal(key, (batch, input_size), jnp.float32)

    # Full forward (start_layer_idx = 0)
    y = jax.block_until_ready(mlp_forward(params, x, start_layer_idx=0))
    y_ref = mlp_ref(params, x)
    assert y.shape == (batch, 1), y.shape
    assert jnp.allclose(y, y_ref, atol=1e-4, rtol=1e-4), "full-path mismatch vs reference"

    # fc2-only path (start_layer_idx = 1)
    xh = jax.random.normal(jax.random.PRNGKey(1), (batch, 64), jnp.float32)
    y1 = jax.block_until_ready(mlp_forward(params, xh, start_layer_idx=1))
    assert jnp.allclose(y1, fc2_ref(params, xh), atol=1e-4, rtol=1e-4), "fc2-path mismatch"

    # Multi-tile grid + padded remainder (B not a multiple of the tile)
    xb = jax.random.normal(jax.random.PRNGKey(2), (300, input_size), jnp.float32)
    yb = jax.block_until_ready(mlp_forward(params, xb, start_layer_idx=0, max_tile_b=128))
    assert yb.shape == (300, 1), yb.shape
    assert jnp.allclose(yb, mlp_ref(params, xb), atol=1e-4, rtol=1e-4), "tiled-path mismatch"

    print("KERNEL_OK")
</pallas_src>

<mosaic_0001>
module attributes {stable_mosaic.version = 11 : i64} {
  func.func @_mlp_full_kernel(%arg0: i32, %arg1: memref<8x32xf32, #tpu.memory_space<vmem>>, %arg2: memref<64x32xf32, #tpu.memory_space<vmem>>, %arg3: memref<64x1xf32, #tpu.memory_space<vmem>>, %arg4: memref<64x1xf32, #tpu.memory_space<vmem>>, %arg5: memref<1x1xf32, #tpu.memory_space<smem>>, %arg6: memref<1x8xf32, #tpu.memory_space<vmem>>) attributes {dimension_semantics = [#tpu.dimension_semantics<parallel>], iteration_bounds = array<i64: 1>, scalar_prefetch = 0 : i64, scratch_operands = 0 : i64, tpu.core_type = #tpu.core_type<tc>, window_params = [{transform_indices = @transform_0, window_bounds = array<i64: 8, 32>}, {pipeline_mode = #tpu.pipeline_mode<synchronous>, transform_indices = @transform_1, window_bounds = array<i64: 64, 32>}, {pipeline_mode = #tpu.pipeline_mode<synchronous>, transform_indices = @transform_2, window_bounds = array<i64: 64, 1>}, {pipeline_mode = #tpu.pipeline_mode<synchronous>, transform_indices = @transform_3, window_bounds = array<i64: 64, 1>}, {transform_indices = @transform_4, window_bounds = array<i64: 1, 1>}, {transform_indices = @transform_5, window_bounds = array<i64: 1, 8>}]} {
    %c0 = arith.constant 0 : index
    %c0_0 = arith.constant 0 : index
    %0 = vector.load %arg1[%c0, %c0_0] : memref<8x32xf32, #tpu.memory_space<vmem>>, vector<8x32xf32>
    %c0_1 = arith.constant 0 : index
    %c0_2 = arith.constant 0 : index
    %1 = vector.load %arg2[%c0_1, %c0_2] : memref<64x32xf32, #tpu.memory_space<vmem>>, vector<64x32xf32>
    %cst = arith.constant dense<0.000000e+00> : vector<64x8xf32>
    %2 = tpu.matmul %1, %0, %cst {dimension_numbers = #tpu.dot_dimension_numbers<[1], [1], [0], [0], [0, 0, 1, 0], [], []>} : vector<64x32xf32>, vector<8x32xf32>, vector<64x8xf32> -> vector<64x8xf32>
    %c0_3 = arith.constant 0 : index
    %c0_4 = arith.constant 0 : index
    %3 = vector.load %arg3[%c0_3, %c0_4] : memref<64x1xf32, #tpu.memory_space<vmem>>, vector<64x1xf32>
    %4 = vector.broadcast %3 : vector<64x1xf32> to vector<64x8xf32>
    %5 = arith.addf %2, %4 : vector<64x8xf32>
    %cst_5 = arith.constant 0.000000e+00 : f32
    %6 = vector.broadcast %cst_5 : f32 to vector<64x8xf32>
    %7 = arith.cmpf ogt, %5, %6 : vector<64x8xf32>
    %cst_6 = arith.constant 2.000000e-01 : f32
    %8 = vector.broadcast %cst_6 : f32 to vector<64x8xf32>
    %9 = arith.mulf %8, %5 : vector<64x8xf32>
    %10 = arith.select %7, %5, %9 : vector<64x8xi1>, vector<64x8xf32>
    %c0_7 = arith.constant 0 : index
    %c0_8 = arith.constant 0 : index
    %11 = vector.load %arg4[%c0_7, %c0_8] : memref<64x1xf32, #tpu.memory_space<vmem>>, vector<64x1xf32>
    %12 = vector.broadcast %11 : vector<64x1xf32> to vector<64x8xf32>
    %13 = arith.mulf %10, %12 : vector<64x8xf32>
    %cst_9 = arith.constant dense<0.000000e+00> : vector<8xf32>
    %14 = vector.multi_reduction <add>, %13, %cst_9 [0] : vector<64x8xf32> to vector<8xf32>
    %15 = vector.shape_cast %14 : vector<8xf32> to vector<1x8xf32>
    %c0_10 = arith.constant 0 : index
    %c0_11 = arith.constant 0 : index
    %16 = memref.load %arg5[%c0_10, %c0_11] : memref<1x1xf32, #tpu.memory_space<smem>>
    %17 = vector.broadcast %16 : f32 to vector<1x8xf32>
    %18 = arith.addf %15, %17 : vector<1x8xf32>
    %c0_12 = arith.constant 0 : index
    %c0_13 = arith.constant 0 : index
    %19 = vector.load %arg6[%c0_12, %c0_13] : memref<1x8xf32, #tpu.memory_space<vmem>>, vector<1x8xf32>
    tpu.vector_store %arg6[%c0_12, %c0_13], %18 {strides = array<i32>} : memref<1x8xf32, #tpu.memory_space<vmem>>, vector<1x8xf32>,
    return
  }
  func.func @transform_0(%arg0: i32) -> (i32, i32) {
    %c0_i32 = arith.constant 0 : i32
    %c0_i32_0 = arith.constant 0 : i32
    return %arg0, %c0_i32 : i32, i32
  }
  func.func @transform_1(%arg0: i32) -> (i32, i32) {
    %c0_i32 = arith.constant 0 : i32
    %c0_i32_0 = arith.constant 0 : i32
    %c0_i32_1 = arith.constant 0 : i32
    return %c0_i32, %c0_i32_0 : i32, i32
  }
  func.func @transform_2(%arg0: i32) -> (i32, i32) {
    %c0_i32 = arith.constant 0 : i32
    %c0_i32_0 = arith.constant 0 : i32
    %c0_i32_1 = arith.constant 0 : i32
    return %c0_i32, %c0_i32_0 : i32, i32
  }
  func.func @transform_3(%arg0: i32) -> (i32, i32) {
    %c0_i32 = arith.constant 0 : i32
    %c0_i32_0 = arith.constant 0 : i32
    %c0_i32_1 = arith.constant 0 : i32
    return %c0_i32, %c0_i32_0 : i32, i32
  }
  func.func @transform_4(%arg0: i32) -> (i32, i32) {
    %c0_i32 = arith.constant 0 : i32
    %c0_i32_0 = arith.constant 0 : i32
    %c0_i32_1 = arith.constant 0 : i32
    return %c0_i32, %c0_i32_0 : i32, i32
  }
  func.func @transform_5(%arg0: i32) -> (i32, i32) {
    %c0_i32 = arith.constant 0 : i32
    %c0_i32_0 = arith.constant 0 : i32
    return %c0_i32, %arg0 : i32, i32
  }
}

</mosaic_0001>

<llo_original>
// kernel: tpu_custom_call.1
$region0: #{tpu_custom_call.1}
  #allocation0 [shape = 'u32[]', space=smem, size = 0x4, offset = 0x4, fixed_abs, tag = 'smem constant byte address 0x4 - core index']
  #allocation1 [shape = 'u32[144,128]{1,0:T(1,128)}', space=vmem, size = 0x12000, scoped, tag = 'internal scratch']
  #allocation2 [shape = 'f32[1,1]{1,0:T(1,128)S(6)}', space=smem, size = 0x200, scoped, tag = 'scoped memory for tpu_custom_call.1']
  %s0 = inlined_call_operand.vmem [shape: f32[8,32], index: 0, kind: input, shape index: {}]
  %s1 = inlined_call_operand.vmem [shape: f32[64,32], index: 1, kind: input, shape index: {}]
  %s2 = inlined_call_operand.vmem [shape: f32[64,1], index: 2, kind: input, shape index: {}]
  %s3 = inlined_call_operand.vmem [shape: f32[64,1], index: 3, kind: input, shape index: {}]
  %s4 = inlined_call_operand.<no memory space> [shape: f32[1,1], index: 4, kind: input, shape index: {}]
  %s5 = inlined_call_operand.hbm [shape: f32[1,8], index: 5, kind: output, shape index: {}]
  %s6 = sld [smem:[#allocation0]]
  $region30: #{tpu_custom_call.1} parent=0
    _
  %s8 = ssub.s32 1, %s6
  %s9 = scalar_select 0, %s8, %s6
  %10 = sst [smem:[#allocation2]] %s4
  $region1: #{tpu_custom_call.1} parent=0
    #allocation3 [shape = 'u8[512]{0}', space=vmem, size = 0x400, scoped, tag = 'output window, operand 0, single buffered']
    #allocation4 [shape = 's32[1]{0}', space=sflag, size = 0x4, scoped, tag = 'scoped memory for tpu_custom_call.1']
    %11 = vsyncpa [#allocation4], 0
    // Predicated region
    $region2: #{tpu_custom_call.1} parent=1 // pred_check
      _
    $region3: #{tpu_custom_call.1} parent=1 // pred_check_branch
      %13 = sbr.rel (0) target = $region5
    $region4: #{tpu_custom_call.1} parent=1 // pred_region
      _
    $region5: #{tpu_custom_call.1} parent=1 // pred_fallthru
      _
    // Predicated region
    $region6: #{tpu_custom_call.1} parent=1 // pred_check
      _
    $region7: #{tpu_custom_call.1} parent=1 // pred_check_branch
      %15 = sbr.rel (0) target = $region9
    $region8: #{tpu_custom_call.1} parent=1 // pred_region
      _
    $region9: #{tpu_custom_call.1} parent=1 // pred_fallthru
      _
    // Predicated region
    $region10: #{tpu_custom_call.1} parent=1 // pred_check
      _
    $region11: #{tpu_custom_call.1} parent=1 // pred_check_branch
      %17 = sbr.rel (0) target = $region13
    $region12: #{tpu_custom_call.1} parent=1 // pred_region
      _
    $region13: #{tpu_custom_call.1} parent=1 // pred_fallthru
      _
    // Predicated region
    $region14: #{tpu_custom_call.1} parent=1 // pred_check
      _
    $region15: #{tpu_custom_call.1} parent=1 // pred_check_branch
      %19 = sbr.rel (0) target = $region17
    $region16: #{tpu_custom_call.1} parent=1 // pred_region
      _
    $region17: #{tpu_custom_call.1} parent=1 // pred_fallthru
      _
    // Predicated region
    $region18: #{tpu_custom_call.1} parent=1 // pred_check
      _
    $region19: #{tpu_custom_call.1} parent=1 // pred_check_branch
      %21 = sbr.rel (0) target = $region21
    $region20: #{tpu_custom_call.1} parent=1 // pred_region
      _
    $region21: #{tpu_custom_call.1} parent=1 // pred_fallthru
      _
    %v22 = vld [vmem:[%s0] sm:$0xff]
    %v23 = vld [vmem:[%s1] sm:$0xff]
    %v24 = vld [vmem:[%s1 + $0x8] sm:$0xff]
    %v25 = vld [vmem:[%s1 + $0x10] sm:$0xff]
    %v26 = vld [vmem:[%s1 + $0x18] sm:$0xff]
    %v27 = vld [vmem:[%s1 + $0x20] sm:$0xff]
    %v28 = vld [vmem:[%s1 + $0x28] sm:$0xff]
    %v29 = vld [vmem:[%s1 + $0x30] sm:$0xff]
    %v30 = vld [vmem:[%s1 + $0x38] sm:$0xff]
    %v31 = vld [vmem:[%s2] sm:$0xff]
    %v32 = vld [vmem:[%s2 + $0x8] sm:$0xff]
    %v33 = vld [vmem:[%s2 + $0x10] sm:$0xff]
    %v34 = vld [vmem:[%s2 + $0x18] sm:$0xff]
    %v35 = vld [vmem:[%s2 + $0x20] sm:$0xff]
    %v36 = vld [vmem:[%s2 + $0x28] sm:$0xff]
    %v37 = vld [vmem:[%s2 + $0x30] sm:$0xff]
    %v38 = vld [vmem:[%s2 + $0x38] sm:$0xff]
    %40 = vset.pattern.permute.xlu0 0
    %41 = vperm.xlu0 %40, %v31
    %v42 = vpop.permute.xlu0 %41
    %45 = vset.pattern.permute.xlu0 0
    %46 = vperm.xlu0 %45, %v32
    %v47 = vpop.permute.xlu0 %46
    %50 = vset.pattern.permute.xlu0 0
    %51 = vperm.xlu0 %50, %v33
    %v52 = vpop.permute.xlu0 %51
    %55 = vset.pattern.permute.xlu0 0
    %56 = vperm.xlu0 %55, %v34
    %v57 = vpop.permute.xlu0 %56
    %60 = vset.pattern.permute.xlu0 0
    %61 = vperm.xlu0 %60, %v35
    %v62 = vpop.permute.xlu0 %61
    %65 = vset.pattern.permute.xlu0 0
    %66 = vperm.xlu0 %65, %v36
    %v67 = vpop.permute.xlu0 %66
    %70 = vset.pattern.permute.xlu0 0
    %71 = vperm.xlu0 %70, %v37
    %v72 = vpop.permute.xlu0 %71
    %75 = vset.pattern.permute.xlu0 0
    %76 = vperm.xlu0 %75, %v38
    %v77 = vpop.permute.xlu0 %76
    %vm79 = vcmask 261120
    %v81 = vsel %vm79, %v23, 0
    %v84 = vsel %vm79, %v24, 0
    %v87 = vsel %vm79, %v25, 0
    %v90 = vsel %vm79, %v26, 0
    %v93 = vsel %vm79, %v27, 0
    %v96 = vsel %vm79, %v28, 0
    %v99 = vsel %vm79, %v29, 0
    %v102 = vsel %vm79, %v30, 0
    %v105 = vsel %vm79, %v22, 0
    %107 = vmatprep.subr.mxu0 0.0
    %108 = vmatpush1.xpose.msra.mxu0 %v105
    %109 = vmatprep.subr.mxu0 0.0
    %110 = vmatpush1.xpose.msra.mxu0 0.0
    %111 = vmatprep.subr.mxu0 0.0
    %112 = vmatpush1.xpose.msra.mxu0 0.0
    %113 = vmatprep.subr.mxu0 0.0
    %114 = vmatpush1.xpose.msra.mxu0 0.0
    %115 = vmatprep.subr.mxu0 0.0
    %116 = vmatpush1.xpose.msra.mxu0 0.0
    %117 = vmatprep.subr.mxu0 0.0
    %118 = vmatpush1.xpose.msra.mxu0 0.0
    %119 = vmatprep.subr.mxu0 0.0
    %120 = vmatpush1.xpose.msra.mxu0 0.0
    %121 = vmatprep.subr.mxu0 0.0
    %122 = vmatpush1.xpose.msra.mxu0 0.0
    %123 = vmatprep.subr.mxu0 0.0
    %124 = vmatpush1.xpose.msra.mxu0 0.0
    %125 = vmatprep.subr.mxu0 0.0
    %126 = vmatpush1.xpose.msra.mxu0 0.0
    %127 = vmatprep.subr.mxu0 0.0
    %128 = vmatpush1.xpose.msra.mxu0 0.0
    %129 = vmatprep.subr.mxu0 0.0
    %130 = vmatpush1.xpose.msra.mxu0 0.0
    %131 = vmatprep.subr.mxu0 0.0
    %132 = vmatpush1.xpose.msra.mxu0 0.0
    %133 = vmatprep.subr.mxu0 0.0
    %134 = vmatpush1.xpose.msra.mxu0 0.0
    %135 = vmatprep.subr.mxu0 0.0
    %136 = vmatpush1.xpose.msra.mxu0 0.0
    %137 = vmatprep.subr.mxu0 0.0
    %138 = vmatpush1.xpose.msra.mxu0 0.0
    %139 = vmatprep.subr.mxu0 0.0
    %140 = vmatpush1.xpose.msra.mxu0 0.0
    %141 = vmatprep.subr.mxu0 0.0
    %142 = vmatpush1.xpose.msra.mxu0 0.0
    %143 = vmatprep.subr.mxu0 0.0
    %144 = vmatpush1.xpose.msra.mxu0 0.0
    %145 = vmatprep.subr.mxu0 0.0
    %146 = vmatpush1.xpose.msra.mxu0 0.0
    %147 = vmatprep.subr.mxu0 0.0
    %148 = vmatpush1.xpose.msra.mxu0 0.0
    %149 = vmatprep.subr.mxu0 0.0
    %150 = vmatpush1.xpose.msra.mxu0 0.0
    %151 = vmatprep.subr.mxu0 0.0
    %152 = vmatpush1.xpose.msra.mxu0 0.0
    %153 = vmatprep.subr.mxu0 0.0
    %154 = vmatpush1.xpose.msra.mxu0 0.0
    %155 = vmatprep.subr.mxu0 0.0
    %156 = vmatpush1.xpose.msra.mxu0 0.0
    %157 = vmatprep.subr.mxu0 0.0
    %158 = vmatpush1.xpose.msra.mxu0 0.0
    %159 = vmatprep.subr.mxu0 0.0
    %160 = vmatpush1.xpose.msra.mxu0 0.0
    %161 = vmatprep.subr.mxu0 0.0
    %162 = vmatpush1.xpose.msra.mxu0 0.0
    %163 = vmatprep.subr.mxu0 0.0
    %164 = vmatpush1.xpose.msra.mxu0 0.0
    %165 = vmatprep.subr.mxu0 0.0
    %166 = vmatpush1.xpose.msra.mxu0 0.0
    %167 = vmatprep.subr.mxu0 0.0
    %168 = vmatpush1.xpose.msra.mxu0 0.0
    %169 = vmatprep.subr.mxu0 0.0
    %170 = vmatpush1.xpose.msra.mxu0 0.0
    %171 = vmatprep.mubr.f32.mxu0 0.0
    %172 = vmatmul.mubr.f32.gmra.mrb[0].mxu0 %v81
    %v173 = vpop.f32.mrb[0].mxu0
    %v174 = vadd.f32 %v42, %v173
    %v175 = vpop.f32.mrb[0].mxu0
    %176 = vmatprep.mubr.f32.mxu0 0.0
    %177 = vmatmul.mubr.f32.gmra.mrb[0].mxu0 %v84
    %v178 = vpop.f32.mrb[0].mxu0
    %v179 = vadd.f32 %v47, %v178
    %v180 = vpop.f32.mrb[0].mxu0
    %181 = vmatprep.mubr.f32.mxu0 0.0
    %182 = vmatmul.mubr.f32.gmra.mrb[0].mxu0 %v87
    %v183 = vpop.f32.mrb[0].mxu0
    %v184 = vadd.f32 %v52, %v183
    %v185 = vpop.f32.mrb[0].mxu0
    %186 = vmatprep.mubr.f32.mxu0 0.0
    %187 = vmatmul.mubr.f32.gmra.mrb[0].mxu0 %v90
    %v188 = vpop.f32.mrb[0].mxu0
    %v189 = vadd.f32 %v57, %v188
    %v190 = vpop.f32.mrb[0].mxu0
    %191 = vmatprep.mubr.f32.mxu0 0.0
    %192 = vmatmul.mubr.f32.gmra.mrb[0].mxu0 %v93
    %v193 = vpop.f32.mrb[0].mxu0
    %v194 = vadd.f32 %v62, %v193
    %v195 = vpop.f32.mrb[0].mxu0
    %196 = vmatprep.mubr.f32.mxu0 0.0
    %197 = vmatmul.mubr.f32.gmra.mrb[0].mxu0 %v96
    %v198 = vpop.f32.mrb[0].mxu0
    %v199 = vadd.f32 %v67, %v198
    %v200 = vpop.f32.mrb[0].mxu0
    %201 = vmatprep.mubr.f32.mxu0 0.0
    %202 = vmatmul.mubr.f32.gmra.mrb[0].mxu0 %v99
    %v203 = vpop.f32.mrb[0].mxu0
    %v204 = vadd.f32 %v72, %v203
    %v205 = vpop.f32.mrb[0].mxu0
    %206 = vmatprep.mubr.f32.mxu0 0.0
    %207 = vmatmul.mubr.f32.gmra.mrb[0].mxu0 %v102
    %v208 = vpop.f32.mrb[0].mxu0
    %v209 = vadd.f32 %v77, %v208
    %v210 = vpop.f32.mrb[0].mxu0
    %211 = vdwg.mxu0
    %vm212 = vcmp.gt.f32.partialorder %v174, 0.0
    %vm213 = vcmp.gt.f32.partialorder %v179, 0.0
    %vm214 = vcmp.gt.f32.partialorder %v184, 0.0
    %vm215 = vcmp.gt.f32.partialorder %v189, 0.0
    %vm216 = vcmp.gt.f32.partialorder %v194, 0.0
    %vm217 = vcmp.gt.f32.partialorder %v199, 0.0
    %vm218 = vcmp.gt.f32.partialorder %v204, 0.0
    %vm219 = vcmp.gt.f32.partialorder %v209, 0.0
    %v220 = vmul.f32 %v174, 0.2
    %v221 = vmul.f32 %v179, 0.2
    %v222 = vmul.f32 %v184, 0.2
    %v223 = vmul.f32 %v189, 0.2
    %v224 = vmul.f32 %v194, 0.2
    %v225 = vmul.f32 %v199, 0.2
    %v226 = vmul.f32 %v204, 0.2
    %v227 = vmul.f32 %v209, 0.2
    %v228 = vsel %vm212, %v174, %v220
    %v229 = vsel %vm213, %v179, %v221
    %v230 = vsel %vm214, %v184, %v222
    %v231 = vsel %vm215, %v189, %v223
    %v232 = vsel %vm216, %v194, %v224
    %v233 = vsel %vm217, %v199, %v225
    %v234 = vsel %vm218, %v204, %v226
    %v235 = vsel %vm219, %v209, %v227
    %v236 = vld [vmem:[%s3] sm:$0xff]
    %v237 = vld [vmem:[%s3 + $0x8] sm:$0xff]
    %v238 = vld [vmem:[%s3 + $0x10] sm:$0xff]
    %v239 = vld [vmem:[%s3 + $0x18] sm:$0xff]
    %v240 = vld [vmem:[%s3 + $0x20] sm:$0xff]
    %v241 = vld [vmem:[%s3 + $0x28] sm:$0xff]
    %v242 = vld [vmem:[%s3 + $0x30] sm:$0xff]
    %v243 = vld [vmem:[%s3 + $0x38] sm:$0xff]
    %245 = vset.pattern.permute.xlu0 0
    %246 = vperm.xlu0 %245, %v236
    %v247 = vpop.permute.xlu0 %246
    %250 = vset.pattern.permute.xlu0 0
    %251 = vperm.xlu0 %250, %v237
    %v252 = vpop.permute.xlu0 %251
    %255 = vset.pattern.permute.xlu0 0
    %256 = vperm.xlu0 %255, %v238
    %v257 = vpop.permute.xlu0 %256
    %260 = vset.pattern.permute.xlu0 0
    %261 = vperm.xlu0 %260, %v239
    %v262 = vpop.permute.xlu0 %261
    %265 = vset.pattern.permute.xlu0 0
    %266 = vperm.xlu0 %265, %v240
    %v267 = vpop.permute.xlu0 %266
    %270 = vset.pattern.permute.xlu0 0
    %271 = vperm.xlu0 %270, %v241
    %v272 = vpop.permute.xlu0 %271
    %275 = vset.pattern.permute.xlu0 0
    %276 = vperm.xlu0 %275, %v242
    %v277 = vpop.permute.xlu0 %276
    %280 = vset.pattern.permute.xlu0 0
    %281 = vperm.xlu0 %280, %v243
    %v282 = vpop.permute.xlu0 %281
    %v284 = vmul.f32 %v228, %v247
    %v285 = vmul.f32 %v229, %v252
    %v286 = vmul.f32 %v230, %v257
    %v287 = vmul.f32 %v231, %v262
    %v288 = vmul.f32 %v232, %v267
    %v289 = vmul.f32 %v233, %v272
    %v290 = vmul.f32 %v234, %v277
    %v291 = vmul.f32 %v235, %v282
    %vm292 = vcmask 64512
    %v293 = vsel %vm292, %v284, 0.0
    %v294 = vsel %vm292, %v285, 0.0
    %v295 = vadd.f32 %v293, %v294
    %v296 = vsel %vm292, %v286, 0.0
    %v297 = vadd.f32 %v295, %v296
    %v298 = vsel %vm292, %v287, 0.0
    %v299 = vadd.f32 %v297, %v298
    %v300 = vsel %vm292, %v288, 0.0
    %v301 = vadd.f32 %v299, %v300
    %v302 = vsel %vm292, %v289, 0.0
    %v303 = vadd.f32 %v301, %v302
    %v304 = vsel %vm292, %v290, 0.0
    %v305 = vadd.f32 %v303, %v304
    %v306 = vsel %vm292, %v291, 0.0
    %v307 = vadd.f32 %v305, %v306
    %v308 = vrot.slane %v307, 4
    %v309 = vadd.f32 %v307, %v308
    %v310 = vrot.slane %v309, 2
    %v311 = vadd.f32 %v309, %v310
    %v312 = vrot.slane %v311, 1
    %v313 = vadd.f32 %v311, %v312
    %s314 = sld [smem:[#allocation2]]
    %v315 = vstv %s314
    %v316 = vadd.f32 %v313, %v315
    %vm317 = vcmask 57344
    %318 = vst.msk [vmem:[#allocation3] sm:$0x1] %vm317, %v316
    // Predicated region
    $region22: #{tpu_custom_call.1} parent=1 // pred_check
      _
    $region23: #{tpu_custom_call.1} parent=1 // pred_check_branch
      %320 = sbr.rel (0) target = $region25
    $region24: #{tpu_custom_call.1} parent=1 // pred_region
      %s322 = ssub.s32 16, 16
      %323 = vsyncadd [#allocation4], %s322
      %s325 = sshll.u32 [#allocation3], 4
      %s326 = int_to_ptr.vmem [resolvable:$true] %s325
      %328 = dma.vmem_to_hbm [thread:$0]  %s326, 16, %s5, [#allocation4]
    $region25: #{tpu_custom_call.1} parent=1 // pred_fallthru
      _
    // Predicated region
    $region26: #{tpu_custom_call.1} parent=1 // pred_check
      _
    $region27: #{tpu_custom_call.1} parent=1 // pred_check_branch
      %330 = sbr.rel (0) target = $region29
    $region28: #{tpu_custom_call.1} parent=1 // pred_region
      %331 = dma.done [#allocation4], 16
    $region29: #{tpu_custom_call.1} parent=1 // pred_fallthru
      _
    %332 = vsyncpa [#allocation4], 1

</llo_original>
